<compile_context>
chip_gen: v6e
topology: v6e:2x2x1
jax: 0.10.0
libtpu: 0.0.40
codegen_flags: <defaults>
</compile_context>

<pallas_src>
import math

import jax
import jax.numpy as jnp
from jax.experimental import pallas as pl
from jax.experimental.pallas import tpu as pltpu


def _round_up(x, m):
    return ((x + m - 1) // m) * m


def _pick_seq_tile(S, cap, min_tiles=1):
    """Largest seq tile (multiple of 8, <= cap) that divides the padded seq len.

    Prefers a tile giving at least `min_tiles` grid steps along the seq axis
    (keeps both v7x TensorCores busy when batch == 1)."""
    S_pad = _round_up(S, 8)
    cap = max(8, (min(cap, S_pad) // 8) * 8)
    for need in (min_tiles, 1):
        t = cap
        while t >= 8:
            if S_pad % t == 0 and S_pad // t >= need:
                return t, S_pad
            t -= 8
    return 8, S_pad


# ----------------------------------------------------------------------------
# Pallas kernel: one (ts, D) row tile of one batch element.
#   x:(1,ts,D) in     | traj:(1,ts,D//2) in | scales:(ts,1) f32 | base:(ts,D) bf16
#   wa:(D,D) bf16     | wd:(D//2,D) bf16     (0.3 already folded into wa/wd/base)
# ----------------------------------------------------------------------------
def _traj_pos_kernel(x_ref, traj_ref, scales_ref, base_ref, wa_ref, wd_ref, o_ref):
    cdt = wa_ref.dtype
    acc = jnp.dot(x_ref[0].astype(cdt), wa_ref[...],
                  preferred_element_type=jnp.float32)
    # Diagonal scaling commutes with the matmul: (s * traj) @ Wd == s * (traj @ Wd),
    # so the per-position sigmoid scale is applied post-dot in f32.
    acc = acc + jnp.dot(traj_ref[0].astype(cdt), wd_ref[...],
                        preferred_element_type=jnp.float32) * scales_ref[...]
    o_ref[0] = (base_ref[...].astype(jnp.float32) + acc).astype(o_ref.dtype)


def trajectory_aware_pos_embedding(params, input_embeddings, trajectories=None, *,
                                   tm=1024, compute_dtype=jnp.bfloat16,
                                   vmem_budget_bytes=40 * 2**20):
    """JAX/Pallas equivalent of TrajectoryAwarePositionalEmbedding.forward."""
    B, S, D = input_embeddings.shape
    out_dtype = input_embeddings.dtype
    pos_emb = params["position_embedding"][:S].astype(jnp.float32)          # (S, D)

    if trajectories is None:
        # Trivial broadcast path — pure glue, no kernel needed.
        return jnp.broadcast_to(pos_emb[None], (B, S, D)).astype(out_dtype)

    dq, dh = D // 4, D // 2
    if trajectories.shape[-1] < dh:
        raise ValueError(
            f"trajectories last dim {trajectories.shape[-1]} < model_dim//2 = {dh}")

    # ---- batch-invariant precompute (plain XLA, done once) -----------------
    # PyTorch Linear weight is (out=D, in=2D); transpose to (2D, D) and split by
    # the concat segments [x (D) | dirs (D//4) | freqs (D//4) | scaled_traj (D//2)].
    w_t = params["proj_weight"].astype(jnp.float32).T                       # (2D, D)
    wa, wb = w_t[:D], w_t[D:D + dq]
    wc, wd = w_t[D + dq:D + dh], w_t[D + dh:]
    bias = params["proj_bias"].astype(jnp.float32)
    dirs = params["trajectory_directions"][:S].astype(jnp.float32)
    freqs = params["trajectory_frequencies"][:S].astype(jnp.float32)

    # base = pos_emb + 0.3 * (dirs@Wb + freqs@Wc + bias)  — batch-invariant.
    # Carried in compute_dtype (bf16) to halve its HBM stream; upcast in-kernel.
    base = (pos_emb + 0.3 * (dirs @ wb + freqs @ wc + bias[None, :])).astype(compute_dtype)
    sig_scales = jax.nn.sigmoid(
        params["position_scales"][:S].astype(jnp.float32)).reshape(S, 1)    # (S, 1)

    # Fold the 0.3 factor into the remaining (batch-dependent) weights.
    wa_s = (0.3 * wa).astype(compute_dtype)                                 # (D, D)
    wd_s = (0.3 * wd).astype(compute_dtype)                                 # (D//2, D)

    # Inputs stay in the caller's dtype; the kernel casts in-VMEM before the dots.
    x_in = input_embeddings                                                 # (B, S, D)
    t_in = trajectories[..., :dh]                                           # (B, S, D//2)

    # ---- VMEM-aware sequence-tile selection --------------------------------
    x_it = jnp.dtype(x_in.dtype).itemsize
    t_it = jnp.dtype(t_in.dtype).itemsize
    o_it = jnp.dtype(out_dtype).itemsize
    c_it = jnp.dtype(compute_dtype).itemsize
    w_bytes = 2 * (D + dh) * D * c_it                    # weights, double-buffered
    # Double-buffered per-row streams (scales tile pads to 128 lanes in VMEM).
    per_row = 2 * (D * x_it + dh * t_it + 128 * 4 + D * c_it + D * o_it)
    ts_cap = max(8, min(int(tm),
                        max(vmem_budget_bytes - w_bytes, 8 * per_row) // per_row))
    ts, S_pad = _pick_seq_tile(S, ts_cap, min_tiles=2 if B == 1 else 1)

    if S_pad != S:
        pad = S_pad - S
        x_in = jnp.pad(x_in, ((0, 0), (0, pad), (0, 0)))
        t_in = jnp.pad(t_in, ((0, 0), (0, pad), (0, 0)))
        base = jnp.pad(base, ((0, pad), (0, 0)))
        sig_scales = jnp.pad(sig_scales, ((0, pad), (0, 0)))

    grid = (S_pad // ts, B)  # seq tiles outer, batch inner -> base/scales DMA'd once per seq tile

    est = ts * per_row + w_bytes
    vmem_limit = int(min(96 * 2**20, max(32 * 2**20, est + 16 * 2**20)))

    flops = int(2 * B * S_pad * (D + dh) * D)
    bytes_accessed = int(B * S_pad * (D * x_it + dh * t_it + D * o_it)
                         + S_pad * (D * c_it + 4) + (D + dh) * D * c_it)
    ce = pl.CostEstimate(flops=flops, transcendentals=0, bytes_accessed=bytes_accessed)

    out = pl.pallas_call(
        _traj_pos_kernel,
        out_shape=jax.ShapeDtypeStruct((B, S_pad, D), out_dtype),
        grid_spec=pltpu.PrefetchScalarGridSpec(
            num_scalar_prefetch=0,
            grid=grid,
            in_specs=[
                pl.BlockSpec((1, ts, D), lambda s, b: (b, s, 0)),    # x rows (caller dtype)
                pl.BlockSpec((1, ts, dh), lambda s, b: (b, s, 0)),   # traj rows (caller dtype)
                pl.BlockSpec((ts, 1), lambda s, b: (s, 0)),          # sigmoid(scales), f32
                pl.BlockSpec((ts, D), lambda s, b: (s, 0)),          # hoisted base, bf16
                pl.BlockSpec((D, D), lambda s, b: (0, 0)),           # 0.3*Wa (constant block)
                pl.BlockSpec((dh, D), lambda s, b: (0, 0)),          # 0.3*Wd (constant block)
            ],
            out_specs=pl.BlockSpec((1, ts, D), lambda s, b: (b, s, 0)),
        ),
        compiler_params=pltpu.CompilerParams(
            dimension_semantics=("parallel", "parallel"),
            vmem_limit_bytes=vmem_limit),
        cost_estimate=ce,
    )(x_in, t_in, sig_scales, base, wa_s, wd_s)

    if S_pad != S:
        out = out[:, :S, :]
    return out


# ----------------------------------------------------------------------------
# Deterministic parameter construction (mirrors the PyTorch __init__ shapes).
# ----------------------------------------------------------------------------
def make_params(model_dim, max_seq_len, seed=42):
    D, L = model_dim, max_seq_len
    k1, k2, k3, k4 = jax.random.split(jax.random.PRNGKey(seed), 4)

    position_embedding = jax.random.normal(k1, (L, D), jnp.float32)        # nn.Embedding

    bound = 1.0 / math.sqrt(2 * D)                                         # nn.Linear(2D, D)
    proj_weight = jax.random.uniform(k2, (D, 2 * D), jnp.float32, -bound, bound)
    proj_bias = jax.random.uniform(k3, (D,), jnp.float32, -bound, bound)

    trajectory_directions = jax.random.normal(k4, (L, D // 4), jnp.float32) * 0.1
    position_scales = jnp.ones((L,), jnp.float32) * 0.5

    position = jnp.arange(L, dtype=jnp.float32)[:, None]
    div_term = jnp.exp(jnp.arange(0, D // 4, 2, dtype=jnp.float32)
                       * -(math.log(10000.0) / (D // 4)))
    freqs = jnp.zeros((L, D // 4), jnp.float32)
    freqs = freqs.at[:, 0::2].set(jnp.sin(position * div_term))
    freqs = freqs.at[:, 1::2].set(jnp.cos(position * div_term))

    return dict(position_embedding=position_embedding,
                proj_weight=proj_weight,
                proj_bias=proj_bias,
                trajectory_directions=trajectory_directions,
                position_scales=position_scales,
                trajectory_frequencies=freqs)


# Pure-JAX reference (mirrors the PyTorch forward) for numerical sanity checks.
def reference_forward(params, x, trajectories):
    B, S, D = x.shape
    pos_emb = params["position_embedding"][:S]
    dirs = jnp.broadcast_to(params["trajectory_directions"][:S][None], (B, S, D // 4))
    freqs = jnp.broadcast_to(params["trajectory_frequencies"][:S][None], (B, S, D // 4))
    scales = jax.nn.sigmoid(params["position_scales"][:S])
    scaled_traj = trajectories * scales[None, :, None]
    traj_comp = jnp.concatenate([dirs, freqs, scaled_traj[:, :, :D // 2]], axis=-1)
    full = jnp.concatenate([x, traj_comp], axis=-1)
    traj_pos = full @ params["proj_weight"].T + params["proj_bias"]
    return pos_emb[None] + 0.3 * traj_pos


if __name__ == "__main__":
    # Case 1: tiny toy shapes (small D, full-extent last-dim blocks, no padding).
    B, S, D = 2, 8, 32
    params = make_params(D, 64, seed=42)
    kx, kt = jax.random.split(jax.random.PRNGKey(0))
    x = jax.random.normal(kx, (B, S, D), jnp.float32)
    traj = jax.random.normal(kt, (B, S, D // 2), jnp.float32)

    out = jax.block_until_ready(trajectory_aware_pos_embedding(params, x, traj))
    ref = reference_forward(params, x, traj)
    assert out.shape == (B, S, D), out.shape
    assert jnp.allclose(out, ref, atol=3e-2, rtol=3e-2), float(jnp.max(jnp.abs(out - ref)))

    # trajectories=None path (plain broadcast, no kernel).
    out_none = jax.block_until_ready(trajectory_aware_pos_embedding(params, x, None))
    assert out_none.shape == (B, S, D)

    # Case 2: lane-dense D, longer S (exercises seq tiling + 2-D grid path).
    B2, S2, D2 = 2, 512, 128
    params2 = make_params(D2, S2, seed=7)
    kx2, kt2 = jax.random.split(jax.random.PRNGKey(1))
    x2 = jax.random.normal(kx2, (B2, S2, D2), jnp.float32)
    traj2 = jax.random.normal(kt2, (B2, S2, D2 // 2), jnp.float32)
    out2 = jax.block_until_ready(trajectory_aware_pos_embedding(params2, x2, traj2))
    ref2 = reference_forward(params2, x2, traj2)
    assert out2.shape == (B2, S2, D2), out2.shape
    assert jnp.allclose(out2, ref2, atol=3e-2, rtol=3e-2), float(jnp.max(jnp.abs(out2 - ref2)))

    print("KERNEL_OK")
</pallas_src>

<mosaic_0001>
module attributes {stable_mosaic.version = 11 : i64} {
  func.func @_traj_pos_kernel(%arg0: i32, %arg1: i32, %arg2: memref<1x8x32xf32, #tpu.memory_space<vmem>>, %arg3: memref<1x8x16xf32, #tpu.memory_space<vmem>>, %arg4: memref<8x1xf32, #tpu.memory_space<vmem>>, %arg5: memref<8x32xbf16, #tpu.memory_space<vmem>>, %arg6: memref<32x32xbf16, #tpu.memory_space<vmem>>, %arg7: memref<16x32xbf16, #tpu.memory_space<vmem>>, %arg8: memref<1x8x32xf32, #tpu.memory_space<vmem>>) attributes {dimension_semantics = [#tpu.dimension_semantics<parallel>, #tpu.dimension_semantics<parallel>], iteration_bounds = array<i64: 1, 2>, scalar_prefetch = 0 : i64, scratch_operands = 0 : i64, tpu.core_type = #tpu.core_type<tc>, window_params = [{transform_indices = @transform_0, window_bounds = array<i64: 1, 8, 32>}, {transform_indices = @transform_1, window_bounds = array<i64: 1, 8, 16>}, {transform_indices = @transform_2, window_bounds = array<i64: 8, 1>}, {transform_indices = @transform_3, window_bounds = array<i64: 8, 32>}, {pipeline_mode = #tpu.pipeline_mode<synchronous>, transform_indices = @transform_4, window_bounds = array<i64: 32, 32>}, {pipeline_mode = #tpu.pipeline_mode<synchronous>, transform_indices = @transform_5, window_bounds = array<i64: 16, 32>}, {transform_indices = @transform_6, window_bounds = array<i64: 1, 8, 32>}]} {
    %c0 = arith.constant 0 : index
    %c0_0 = arith.constant 0 : index
    %c0_1 = arith.constant 0 : index
    %0 = vector.load %arg2[%c0, %c0_0, %c0_1] : memref<1x8x32xf32, #tpu.memory_space<vmem>>, vector<1x8x32xf32>
    %1 = vector.shape_cast %0 : vector<1x8x32xf32> to vector<8x32xf32>
    %2 = arith.truncf %1 : vector<8x32xf32> to vector<8x32xbf16>
    %c0_2 = arith.constant 0 : index
    %c0_3 = arith.constant 0 : index
    %3 = vector.load %arg6[%c0_2, %c0_3] : memref<32x32xbf16, #tpu.memory_space<vmem>>, vector<32x32xbf16>
    %cst = arith.constant dense<0.000000e+00> : vector<8x32xf32>
    %4 = tpu.matmul %2, %3, %cst {dimension_numbers = #tpu.dot_dimension_numbers<[1], [0], [0], [1], [0, 0, 1, 1], [], []>} : vector<8x32xbf16>, vector<32x32xbf16>, vector<8x32xf32> -> vector<8x32xf32>
    %c0_4 = arith.constant 0 : index
    %c0_5 = arith.constant 0 : index
    %c0_6 = arith.constant 0 : index
    %5 = vector.load %arg3[%c0_4, %c0_5, %c0_6] : memref<1x8x16xf32, #tpu.memory_space<vmem>>, vector<1x8x16xf32>
    %6 = vector.shape_cast %5 : vector<1x8x16xf32> to vector<8x16xf32>
    %7 = arith.truncf %6 : vector<8x16xf32> to vector<8x16xbf16>
    %c0_7 = arith.constant 0 : index
    %c0_8 = arith.constant 0 : index
    %8 = vector.load %arg7[%c0_7, %c0_8] : memref<16x32xbf16, #tpu.memory_space<vmem>>, vector<16x32xbf16>
    %cst_9 = arith.constant dense<0.000000e+00> : vector<8x32xf32>
    %9 = tpu.matmul %7, %8, %cst_9 {dimension_numbers = #tpu.dot_dimension_numbers<[1], [0], [0], [1], [0, 0, 1, 1], [], []>} : vector<8x16xbf16>, vector<16x32xbf16>, vector<8x32xf32> -> vector<8x32xf32>
    %c0_10 = arith.constant 0 : index
    %c0_11 = arith.constant 0 : index
    %10 = vector.load %arg4[%c0_10, %c0_11] : memref<8x1xf32, #tpu.memory_space<vmem>>, vector<8x1xf32>
    %11 = vector.broadcast %10 : vector<8x1xf32> to vector<8x32xf32>
    %12 = arith.mulf %9, %11 : vector<8x32xf32>
    %13 = arith.addf %4, %12 : vector<8x32xf32>
    %c0_12 = arith.constant 0 : index
    %c0_13 = arith.constant 0 : index
    %14 = vector.load %arg5[%c0_12, %c0_13] : memref<8x32xbf16, #tpu.memory_space<vmem>>, vector<8x32xbf16>
    %15 = arith.extf %14 : vector<8x32xbf16> to vector<8x32xf32>
    %16 = arith.addf %15, %13 : vector<8x32xf32>
    %c0_14 = arith.constant 0 : index
    %c0_15 = arith.constant 0 : index
    %c0_16 = arith.constant 0 : index
    %17 = vector.load %arg8[%c0_14, %c0_15, %c0_16] : memref<1x8x32xf32, #tpu.memory_space<vmem>>, vector<1x8x32xf32>
    %18 = vector.shape_cast %17 : vector<1x8x32xf32> to vector<8x32xf32>
    %19 = vector.shape_cast %16 : vector<8x32xf32> to vector<1x8x32xf32>
    tpu.vector_store %arg8[%c0_14, %c0_15, %c0_16], %19 {strides = array<i32>} : memref<1x8x32xf32, #tpu.memory_space<vmem>>, vector<1x8x32xf32>,
    return
  }
  func.func @transform_0(%arg0: i32, %arg1: i32) -> (i32, i32, i32) {
    %c0_i32 = arith.constant 0 : i32
    %c0_i32_0 = arith.constant 0 : i32
    return %arg1, %arg0, %c0_i32 : i32, i32, i32
  }
  func.func @transform_1(%arg0: i32, %arg1: i32) -> (i32, i32, i32) {
    %c0_i32 = arith.constant 0 : i32
    %c0_i32_0 = arith.constant 0 : i32
    return %arg1, %arg0, %c0_i32 : i32, i32, i32
  }
  func.func @transform_2(%arg0: i32, %arg1: i32) -> (i32, i32) {
    %c0_i32 = arith.constant 0 : i32
    %c0_i32_0 = arith.constant 0 : i32
    return %arg0, %c0_i32 : i32, i32
  }
  func.func @transform_3(%arg0: i32, %arg1: i32) -> (i32, i32) {
    %c0_i32 = arith.constant 0 : i32
    %c0_i32_0 = arith.constant 0 : i32
    return %arg0, %c0_i32 : i32, i32
  }
  func.func @transform_4(%arg0: i32, %arg1: i32) -> (i32, i32) {
    %c0_i32 = arith.constant 0 : i32
    %c0_i32_0 = arith.constant 0 : i32
    %c0_i32_1 = arith.constant 0 : i32
    return %c0_i32, %c0_i32_0 : i32, i32
  }
  func.func @transform_5(%arg0: i32, %arg1: i32) -> (i32, i32) {
    %c0_i32 = arith.constant 0 : i32
    %c0_i32_0 = arith.constant 0 : i32
    %c0_i32_1 = arith.constant 0 : i32
    return %c0_i32, %c0_i32_0 : i32, i32
  }
  func.func @transform_6(%arg0: i32, %arg1: i32) -> (i32, i32, i32) {
    %c0_i32 = arith.constant 0 : i32
    %c0_i32_0 = arith.constant 0 : i32
    return %arg1, %arg0, %c0_i32 : i32, i32, i32
  }
}

</mosaic_0001>

<llo_original>
// kernel: tpu_custom_call.1
$region0: #{tpu_custom_call.1}
  #allocation0 [shape = 'u32[]', space=smem, size = 0x4, offset = 0x4, fixed_abs, tag = 'smem constant byte address 0x4 - core index']
  #allocation1 [shape = 'u32[144,128]{1,0:T(1,128)}', space=vmem, size = 0x12000, scoped, tag = 'internal scratch']
  %s0 = inlined_call_operand.hbm [shape: f32[2,8,32], index: 0, kind: input, shape index: {}]
  %s1 = inlined_call_operand.hbm [shape: f32[2,8,16], index: 1, kind: input, shape index: {}]
  %s2 = inlined_call_operand.vmem [shape: f32[8,1], index: 2, kind: input, shape index: {}]
  %s3 = inlined_call_operand.hbm [shape: bf16[8,32], index: 3, kind: input, shape index: {}]
  %s4 = inlined_call_operand.vmem [shape: bf16[32,32], index: 4, kind: input, shape index: {}]
  %s5 = inlined_call_operand.hbm [shape: bf16[16,32], index: 5, kind: input, shape index: {}]
  %s6 = inlined_call_operand.hbm [shape: f32[2,8,32], index: 6, kind: output, shape index: {}]
  %s7 = sld [smem:[#allocation0]]
  $region73: #{tpu_custom_call.1} parent=0
    _
  %s9 = ssub.s32 1, %s7
  %s10 = scalar_select 0, %s9, %s7
  $region1: #{tpu_custom_call.1} parent=0
    #allocation2 [shape = 'u8[8192]{0}', space=vmem, size = 0x2000, scoped, tag = 'input window, operand 0']
    #allocation3 [shape = 's32[2]{0}', space=sflag, size = 0x8, scoped, tag = 'scoped memory for tpu_custom_call.1']
    #allocation4 [shape = 's32[2]{0}', space=sflag, size = 0x8, scoped, tag = 'scoped memory for tpu_custom_call.1']
    #allocation5 [shape = 'u8[8192]{0}', space=vmem, size = 0x2000, scoped, tag = 'input window, operand 1']
    #allocation6 [shape = 's32[2]{0}', space=sflag, size = 0x8, scoped, tag = 'scoped memory for tpu_custom_call.1']
    #allocation7 [shape = 'u8[2048]{0}', space=vmem, size = 0x800, scoped, tag = 'input window, operand 3, single buffered']
    #allocation8 [shape = 'u8[4096]{0}', space=vmem, size = 0x1000, scoped, tag = 'input window, operand 5, single buffered']
    #allocation9 [shape = 's32[1]{0}', space=sflag, size = 0x4, scoped, tag = 'scoped memory for tpu_custom_call.1']
    #allocation10 [shape = 'u8[8192]{0}', space=vmem, size = 0x2000, scoped, tag = 'output window, operand 0']
    %11 = vsyncpa [#allocation3], 0
    %s12 = scalar_lea.sflag [#allocation3], 1
    %13 = vsyncpa %s12, 0
    %14 = vsyncpa [#allocation6], 0
    %s15 = scalar_lea.sflag [#allocation6], 1
    %16 = vsyncpa %s15, 0
    %17 = vsyncpa [#allocation9], 0
    %18 = vsyncpa [#allocation4], 0
    %s19 = scalar_lea.sflag [#allocation4], 1
    %20 = vsyncpa %s19, 0
    loop: start=0, step=1, limit=4
    $region2: #{tpu_custom_call.1} parent=1 // loop_pre_header
      _
    $region3: #{tpu_custom_call.1} parent=1 // loop_header
      %s22 = sphi 0, %s26
      %p23 = scmp.ge.s32.totalorder %s22, 4
      %s29 = sphi 0, %s41
      %s30 = sphi 0, %s37
      %s31 = sphi 0, %s29
      %s32 = sphi 0, %s30
      %s33 = sphi 0, %s31
      %s34 = sphi 0, %s32
      %s46 = sphi 0, %s48
      %s49 = sphi 0, %s46
      %s50 = sphi 0, %s49
      %s66 = sphi 0, %s50
      %s74 = sphi 0, %s76
      %s77 = sphi 0, %s74
      %s78 = sphi 0, %s77
      %s94 = sphi 0, %s78
      %s100 = sphi 0, %s102
      %s103 = sphi 0, %s100
      %s104 = sphi 0, %s103
      %s120 = sphi 0, %s104
      %s126 = sphi 0, %s128
      %s129 = sphi 0, %s126
      %s130 = sphi 0, %s129
      %s146 = sphi 0, %s130
      %s150 = sphi 0, %s150
      %s152 = sphi 0, %s150
      %s153 = sphi 0, %s152
      %s167 = sphi 0, %s153
      %s171 = sphi 0, %s171
      %s173 = sphi 0, %s171
      %s174 = sphi 0, %s173
      %s188 = sphi 0, %s174
      %s196 = sphi 0, %s198
      %s199 = sphi 0, %s196
      %s200 = sphi 0, %s199
      %s216 = sphi 0, %s200
    $region4: #{tpu_custom_call.1} parent=1 // loop_header_branch
      %25 = sbr.rel (%p23) target = $region8
    $region5: #{tpu_custom_call.1} parent=1 // loop_body
      %s27 = ssub.s32 %s22, 1
      %s28 = ssub.s32 %s22, 2
      %s35 = sadd.s32 1, %s30
      %p36 = scmp.ge.s32.totalorder %s35, 2
      %s37 = scalar_select %p36, 0, %s35
      %s38 = sadd.s32 1, %s29
      %s39 = scalar_select %p36, %s38, %s29
      %p40 = scmp.ge.s32.totalorder %s39, 1
      %s41 = scalar_select %p40, 0, %s39
      %s42 = ssub.s32 %s30, %s37
      %s43 = ssub.s32 %s29, %s41
      %s44 = sor.u32 %s42, %s43
      %p45 = scmp.eq.s32.totalorder %s44, 0
      %s47 = sadd.s32 %s46, 1
      %s48 = scalar_select %p45, %s46, %s47
      %p51 = pneg %p45
      %p52 = scmp.eq.s32.totalorder %s22, 1
      %p53 = por %p51, %p52
      %p54 = scmp.ne.s32.totalorder %s46, %s49
      %p55 = scmp.eq.s32.totalorder %s22, 0
      %p56 = por %p54, %p55
      %p57 = scmp.ne.s32.totalorder %s46, %s49
      %p58 = scmp.eq.s32.totalorder %s27, 1
      %p59 = por %p57, %p58
      %p60 = scmp.ne.s32.totalorder %s49, %s50
      %p61 = scmp.eq.s32.totalorder %s27, 0
      %p62 = por %p60, %p61
      %p63 = scmp.ne.s32.totalorder %s49, %s50
      %p64 = scmp.eq.s32.totalorder %s28, 1
      %p65 = por %p63, %p64
      %p67 = scmp.ne.s32.totalorder %s50, %s66
      %p68 = scmp.eq.s32.totalorder %s28, 0
      %p69 = por %p67, %p68
      %s70 = ssub.s32 %s30, %s37
      %s71 = ssub.s32 %s29, %s41
      %s72 = sor.u32 %s70, %s71
      %p73 = scmp.eq.s32.totalorder %s72, 0
      %s75 = sadd.s32 %s74, 1
      %s76 = scalar_select %p73, %s74, %s75
      %p79 = pneg %p73
      %p80 = scmp.eq.s32.totalorder %s22, 1
      %p81 = por %p79, %p80
      %p82 = scmp.ne.s32.totalorder %s74, %s77
      %p83 = scmp.eq.s32.totalorder %s22, 0
      %p84 = por %p82, %p83
      %p85 = scmp.ne.s32.totalorder %s74, %s77
      %p86 = scmp.eq.s32.totalorder %s27, 1
      %p87 = por %p85, %p86
      %p88 = scmp.ne.s32.totalorder %s77, %s78
      %p89 = scmp.eq.s32.totalorder %s27, 0
      %p90 = por %p88, %p89
      %p91 = scmp.ne.s32.totalorder %s77, %s78
      %p92 = scmp.eq.s32.totalorder %s28, 1
      %p93 = por %p91, %p92
      %p95 = scmp.ne.s32.totalorder %s78, %s94
      %p96 = scmp.eq.s32.totalorder %s28, 0
      %p97 = por %p95, %p96
      %s98 = ssub.s32 %s29, %s41
      %p99 = scmp.eq.s32.totalorder %s98, 0
      %s101 = sadd.s32 %s100, 1
      %s102 = scalar_select %p99, %s100, %s101
      %p105 = pneg %p99
      %p106 = scmp.eq.s32.totalorder %s22, 1
      %p107 = por %p105, %p106
      %p108 = scmp.ne.s32.totalorder %s100, %s103
      %p109 = scmp.eq.s32.totalorder %s22, 0
      %p110 = por %p108, %p109
      %p111 = scmp.ne.s32.totalorder %s100, %s103
      %p112 = scmp.eq.s32.totalorder %s27, 1
      %p113 = por %p111, %p112
      %p114 = scmp.ne.s32.totalorder %s103, %s104
      %p115 = scmp.eq.s32.totalorder %s27, 0
      %p116 = por %p114, %p115
      %p117 = scmp.ne.s32.totalorder %s103, %s104
      %p118 = scmp.eq.s32.totalorder %s28, 1
      %p119 = por %p117, %p118
      %p121 = scmp.ne.s32.totalorder %s104, %s120
      %p122 = scmp.eq.s32.totalorder %s28, 0
      %p123 = por %p121, %p122
      %s124 = ssub.s32 %s29, %s41
      %p125 = scmp.eq.s32.totalorder %s124, 0
      %s127 = sadd.s32 %s126, 1
      %s128 = scalar_select %p125, %s126, %s127
      %p131 = pneg %p125
      %p132 = scmp.eq.s32.totalorder %s22, 1
      %p133 = por %p131, %p132
      %p134 = scmp.ne.s32.totalorder %s126, %s129
      %p135 = scmp.eq.s32.totalorder %s22, 0
      %p136 = por %p134, %p135
      %p137 = scmp.ne.s32.totalorder %s126, %s129
      %p138 = scmp.eq.s32.totalorder %s27, 1
      %p139 = por %p137, %p138
      %p140 = scmp.ne.s32.totalorder %s129, %s130
      %p141 = scmp.eq.s32.totalorder %s27, 0
      %p142 = por %p140, %p141
      %p143 = scmp.ne.s32.totalorder %s129, %s130
      %p144 = scmp.eq.s32.totalorder %s28, 1
      %p145 = por %p143, %p144
      %p147 = scmp.ne.s32.totalorder %s130, %s146
      %p148 = scmp.eq.s32.totalorder %s28, 0
      %p149 = por %p147, %p148
      %s151 = sadd.s32 %s150, 1
      %p154 = scmp.eq.s32.totalorder %s22, 1
      %p155 = scmp.ne.s32.totalorder %s150, %s152
      %p156 = scmp.eq.s32.totalorder %s22, 0
      %p157 = por %p155, %p156
      %p158 = scmp.ne.s32.totalorder %s150, %s152
      %p159 = scmp.eq.s32.totalorder %s27, 1
      %p160 = por %p158, %p159
      %p161 = scmp.ne.s32.totalorder %s152, %s153
      %p162 = scmp.eq.s32.totalorder %s27, 0
      %p163 = por %p161, %p162
      %p164 = scmp.ne.s32.totalorder %s152, %s153
      %p165 = scmp.eq.s32.totalorder %s28, 1
      %p166 = por %p164, %p165
      %p168 = scmp.ne.s32.totalorder %s153, %s167
      %p169 = scmp.eq.s32.totalorder %s28, 0
      %p170 = por %p168, %p169
      %s172 = sadd.s32 %s171, 1
      %p175 = scmp.eq.s32.totalorder %s22, 1
      %p176 = scmp.ne.s32.totalorder %s171, %s173
      %p177 = scmp.eq.s32.totalorder %s22, 0
      %p178 = por %p176, %p177
      %p179 = scmp.ne.s32.totalorder %s171, %s173
      %p180 = scmp.eq.s32.totalorder %s27, 1
      %p181 = por %p179, %p180
      %p182 = scmp.ne.s32.totalorder %s173, %s174
      %p183 = scmp.eq.s32.totalorder %s27, 0
      %p184 = por %p182, %p183
      %p185 = scmp.ne.s32.totalorder %s173, %s174
      %p186 = scmp.eq.s32.totalorder %s28, 1
      %p187 = por %p185, %p186
      %p189 = scmp.ne.s32.totalorder %s174, %s188
      %p190 = scmp.eq.s32.totalorder %s28, 0
      %p191 = por %p189, %p190
      %s192 = ssub.s32 %s30, %s37
      %s193 = ssub.s32 %s29, %s41
      %s194 = sor.u32 %s192, %s193
      %p195 = scmp.eq.s32.totalorder %s194, 0
      %s197 = sadd.s32 %s196, 1
      %s198 = scalar_select %p195, %s196, %s197
      %p201 = pneg %p195
      %p202 = scmp.eq.s32.totalorder %s22, 1
      %p203 = por %p201, %p202
      %p204 = scmp.ne.s32.totalorder %s196, %s199
      %p205 = scmp.eq.s32.totalorder %s22, 0
      %p206 = por %p204, %p205
      %p207 = scmp.ne.s32.totalorder %s196, %s199
      %p208 = scmp.eq.s32.totalorder %s27, 1
      %p209 = por %p207, %p208
      %p210 = scmp.ne.s32.totalorder %s199, %s200
      %p211 = scmp.eq.s32.totalorder %s27, 0
      %p212 = por %p210, %p211
      %p213 = scmp.ne.s32.totalorder %s199, %s200
      %p214 = scmp.eq.s32.totalorder %s28, 1
      %p215 = por %p213, %p214
      %p217 = scmp.ne.s32.totalorder %s200, %s216
      %p218 = scmp.eq.s32.totalorder %s28, 0
      %p219 = por %p217, %p218
      %p220 = scmp.le.s32.totalorder 1, %s22
      %p221 = scmp.lt.s32.totalorder %s22, 3
      %p222 = pnand %p220, %p221
      %p223 = pneg %p222
      // Predicated region
      $region9: #{tpu_custom_call.1} parent=5 // pred_check
        _
      $region10: #{tpu_custom_call.1} parent=5 // pred_check_branch
        %225 = sbr.rel (%p222) target = $region12
      $region11: #{tpu_custom_call.1} parent=5 // pred_region
        %s226 = ssub.s32 %s22, 1
        // Predicated region
        $region13: #{tpu_custom_call.1} parent=11 // pred_check
          %p227 = pneg %p116
        $region14: #{tpu_custom_call.1} parent=11 // pred_check_branch
          %229 = sbr.rel (%p227) target = $region16
        $region15: #{tpu_custom_call.1} parent=11 // pred_region
          %p230 = scmp.lt.s32.totalorder %s31, 0
          %s231 = scalar_select %p230, %s31, 0
          %s232 = smul.addr %s231, 8
          %s233 = scalar_lea.vmem %s2, %s232
        $region16: #{tpu_custom_call.1} parent=11 // pred_fallthru
          _
        // Predicated region
        $region17: #{tpu_custom_call.1} parent=11 // pred_check
          %p234 = pneg %p142
        $region18: #{tpu_custom_call.1} parent=11 // pred_check_branch
          %236 = sbr.rel (%p234) target = $region20
        $region19: #{tpu_custom_call.1} parent=11 // pred_region
          %s238 = ssub.s32 64, 64
          %239 = vsyncadd [#allocation6], %s238
          %s240 = smul.addr %s31, 64
          %s241 = scalar_lea.hbm %s3, %s240
          %s243 = sshll.u32 [#allocation7], 4
          %s244 = int_to_ptr.vmem [resolvable:$true] %s243
          %246 = dma.hbm_to_vmem [thread:$0]  %s241, 64, %s244, [#allocation6]
        $region20: #{tpu_custom_call.1} parent=11 // pred_fallthru
          _
        // Predicated region
        $region21: #{tpu_custom_call.1} parent=11 // pred_check
          %p247 = pneg %p163
        $region22: #{tpu_custom_call.1} parent=11 // pred_check_branch
          %249 = sbr.rel (%p247) target = $region24
        $region23: #{tpu_custom_call.1} parent=11 // pred_region
          _
        $region24: #{tpu_custom_call.1} parent=11 // pred_fallthru
          _
        // Predicated region
        $region25: #{tpu_custom_call.1} parent=11 // pred_check
          %p250 = pneg %p184
        $region26: #{tpu_custom_call.1} parent=11 // pred_check_branch
          %252 = sbr.rel (%p250) target = $region28
        $region27: #{tpu_custom_call.1} parent=11 // pred_region
          %s254 = ssub.s32 128, 128
          %255 = vsyncadd [#allocation9], %s254
          %s256 = sshll.u32 [#allocation8], 4
          %s257 = int_to_ptr.vmem [resolvable:$true] %s256
          %262 = dma.hbm_to_vmem [thread:$0]  %s5, 128, %s257, [#allocation9], 64, 64, 4
        $region28: #{tpu_custom_call.1} parent=11 // pred_fallthru
          _
      $region12: #{tpu_custom_call.1} parent=5 // pred_fallthru
        _
      %p263 = scmp.lt.s32.totalorder %s22, 2
      // Predicated region
      $region29: #{tpu_custom_call.1} parent=5 // pred_check
        %p264 = pneg %p263
      $region30: #{tpu_custom_call.1} parent=5 // pred_check_branch
        %266 = sbr.rel (%p264) target = $region32
      $region31: #{tpu_custom_call.1} parent=5 // pred_region
        // Predicated region
        $region33: #{tpu_custom_call.1} parent=31 // pred_check
          %p267 = pneg %p56
        $region34: #{tpu_custom_call.1} parent=31 // pred_check_branch
          %269 = sbr.rel (%p267) target = $region36
        $region35: #{tpu_custom_call.1} parent=31 // pred_region
          %s270 = sand.u32 %s46, 1
          %s271 = scalar_lea.sflag [#allocation3], %s270
          %s272 = sand.u32 %s46, 1
          %s273 = smul.addr %s272, 8
          %s274 = scalar_lea.vmem [#allocation2], %s273
          %s276 = ssub.s32 128, 128
          %277 = vsyncadd %s271, %s276
          %s278 = sadd.s32 %s29, %s30
          %s279 = smul.addr %s278, 128
          %s280 = scalar_lea.hbm %s0, %s279
          %s282 = sshll.u32 %s274, 4
          %s283 = int_to_ptr.vmem [resolvable:$true] %s282
          %285 = dma.hbm_to_vmem [thread:$0]  %s280, 128, %s283, %s271
        $region36: #{tpu_custom_call.1} parent=31 // pred_fallthru
          _
        // Predicated region
        $region37: #{tpu_custom_call.1} parent=31 // pred_check
          %p286 = pneg %p84
        $region38: #{tpu_custom_call.1} parent=31 // pred_check_branch
          %288 = sbr.rel (%p286) target = $region40
        $region39: #{tpu_custom_call.1} parent=31 // pred_region
          %s289 = sand.u32 %s22, 1
          %s290 = scalar_lea.sflag [#allocation6], %s289
          %s291 = sand.u32 %s74, 1
          %s292 = smul.addr %s291, 8
          %s293 = scalar_lea.vmem [#allocation5], %s292
          %s295 = ssub.s32 128, 128
          %296 = vsyncadd %s290, %s295
          %s297 = sadd.s32 %s29, %s30
          %s298 = smul.addr %s297, 128
          %s299 = scalar_lea.hbm %s1, %s298
          %s301 = sshll.u32 %s293, 4
          %s302 = int_to_ptr.vmem [resolvable:$true] %s301
          %304 = dma.hbm_to_vmem [thread:$0]  %s299, 128, %s302, %s290
        $region40: #{tpu_custom_call.1} parent=31 // pred_fallthru
          _
      $region32: #{tpu_custom_call.1} parent=5 // pred_fallthru
        _
      %p305 = scmp.le.s32.totalorder 1, %s22
      %p306 = scmp.lt.s32.totalorder %s22, 3
      %p307 = pnand %p305, %p306
      %p308 = pneg %p307
      // Predicated region
      $region41: #{tpu_custom_call.1} parent=5 // pred_check
        _
      $region42: #{tpu_custom_call.1} parent=5 // pred_check_branch
        %310 = sbr.rel (%p307) target = $region44
      $region43: #{tpu_custom_call.1} parent=5 // pred_region
        %s311 = ssub.s32 %s22, 1
        %s312 = sand.u32 %s49, 1
        %s313 = scalar_lea.sflag [#allocation3], %s312
        %s314 = sand.u32 %s49, 1
        %s315 = smul.addr %s314, 8
        %s316 = scalar_lea.vmem [#allocation2], %s315
        // Predicated region
        $region45: #{tpu_custom_call.1} parent=43 // pred_check
          %p317 = pneg %p62
        $region46: #{tpu_custom_call.1} parent=43 // pred_check_branch
          %319 = sbr.rel (%p317) target = $region48
        $region47: #{tpu_custom_call.1} parent=43 // pred_region
          %320 = dma.done %s313, 128
        $region48: #{tpu_custom_call.1} parent=43 // pred_fallthru
          _
        %s321 = sand.u32 %s27, 1
        %s322 = scalar_lea.sflag [#allocation6], %s321
        %s323 = sand.u32 %s77, 1
        %s324 = smul.addr %s323, 8
        %s325 = scalar_lea.vmem [#allocation5], %s324
        // Predicated region
        $region49: #{tpu_custom_call.1} parent=43 // pred_check
          %p326 = pneg %p90
        $region50: #{tpu_custom_call.1} parent=43 // pred_check_branch
          %328 = sbr.rel (%p326) target = $region52
        $region51: #{tpu_custom_call.1} parent=43 // pred_region
          %329 = dma.done %s322, 128
        $region52: #{tpu_custom_call.1} parent=43 // pred_fallthru
          _
        // Predicated region
        $region53: #{tpu_custom_call.1} parent=43 // pred_check
          %p330 = pneg %p142
        $region54: #{tpu_custom_call.1} parent=43 // pred_check_branch
          %332 = sbr.rel (%p330) target = $region56
        $region55: #{tpu_custom_call.1} parent=43 // pred_region
          %333 = dma.done [#allocation6], 64
        $region56: #{tpu_custom_call.1} parent=43 // pred_fallthru
          _
        // Predicated region
        $region57: #{tpu_custom_call.1} parent=43 // pred_check
          %p334 = pneg %p184
        $region58: #{tpu_custom_call.1} parent=43 // pred_check_branch
          %336 = sbr.rel (%p334) target = $region60
        $region59: #{tpu_custom_call.1} parent=43 // pred_region
          %337 = dma.done [#allocation9], 128
        $region60: #{tpu_custom_call.1} parent=43 // pred_fallthru
          _
        %s338 = sand.u32 %s49, 1
        %s339 = scalar_lea.sflag [#allocation3], %s338
        %s340 = sand.u32 %s49, 1
        %s341 = smul.addr %s340, 8
        %s342 = scalar_lea.vmem [#allocation2], %s341
        %p343 = pneg %p62
        %p344 = pneg %p59
        %s345 = sand.u32 %s27, 1
        %s346 = scalar_lea.sflag [#allocation6], %s345
        %s347 = sand.u32 %s77, 1
        %s348 = smul.addr %s347, 8
        %s349 = scalar_lea.vmem [#allocation5], %s348
        %p350 = pneg %p90
        %p351 = pneg %p87
        %p352 = scmp.lt.s32.totalorder %s31, 0
        %s353 = scalar_select %p352, %s31, 0
        %s354 = smul.addr %s353, 8
        %s355 = scalar_lea.vmem %s2, %s354
        %p356 = pneg %p116
        %p357 = pneg %p113
        %p358 = pneg %p142
        %p359 = pneg %p139
        %p360 = pneg %p163
        %p361 = pneg %p160
        %p362 = pneg %p184
        %p363 = pneg %p181
        %p364 = pneg %p212
        %p365 = pneg %p209
        %s366 = sand.u32 %s199, 1
        %s367 = scalar_lea.sflag [#allocation4], %s366
        %s368 = sand.u32 %s199, 1
        %s369 = smul.addr %s368, 8
        %s370 = scalar_lea.vmem [#allocation10], %s369
        %p371 = scmp.lt.s32.totalorder %s31, 0
        %s372 = scalar_select %p371, %s31, 0
        %s373 = smul.addr %s372, 8
        %s374 = scalar_lea.vmem %s2, %s373
        %v376 = vld [vmem:[%s316] sm:$0xff]
        %v377 = vpack.c.bf16 %v376, %v376
        %v378 = vld [vmem:[%s4] sm:$0xf]
        %v379 = vld [vmem:[%s4 + $0x4] sm:$0xf]
        %v380 = vld [vmem:[%s4 + $0x8] sm:$0xf]
        %v381 = vld [vmem:[%s4 + $0xc] sm:$0xf]
        %v382 = vld [vmem:[%s325] sm:$0xff]
        %v383 = vpack.c.bf16 %v382, %v382
        %v384 = vld [vmem:[#allocation8] sm:$0xf]
        %v385 = vld [vmem:[#allocation8 + $0x4] sm:$0xf]
        %v388 = vunpack.c.l.b16 %v384
        %v389 = vunpack.c.l.b16 %v385
        %v390 = vpack.c.b16 %v389, %v388
        %vm392 = vcmask 130048
        %v394 = vsel %vm392, %v383, 0
        %396 = vmatprep.subr.bf16.mxu0 0
        %397 = vmatpush1.bf16.msra.mxu0 0
        %398 = vmatprep.subr.bf16.mxu0 0
        %399 = vmatpush1.bf16.msra.mxu0 0
        %400 = vmatprep.subr.bf16.mxu0 0
        %401 = vmatpush1.bf16.msra.mxu0 0
        %402 = vmatprep.subr.bf16.mxu0 0
        %403 = vmatpush1.bf16.msra.mxu0 0
        %404 = vmatprep.subr.bf16.mxu0 0
        %405 = vmatpush1.bf16.msra.mxu0 0
        %406 = vmatprep.subr.bf16.mxu0 0
        %407 = vmatpush1.bf16.msra.mxu0 0
        %408 = vmatprep.subr.bf16.mxu0 0
        %409 = vmatpush1.bf16.msra.mxu0 0
        %410 = vmatprep.subr.bf16.mxu0 0
        %411 = vmatpush1.bf16.msra.mxu0 %v390
        %412 = vmatprep.subr.bf16.mxu0 0
        %413 = vmatpush2.bf16.msra.mxu0 0
        %414 = vmatprep.subr.bf16.mxu0 0
        %415 = vmatpush2.bf16.msra.mxu0 0
        %416 = vmatprep.subr.bf16.mxu0 0
        %417 = vmatpush2.bf16.msra.mxu0 0
        %418 = vmatprep.subr.bf16.mxu0 0
        %419 = vmatpush2.bf16.msra.mxu0 0
        %420 = vmatprep.subr.bf16.mxu0 0
        %421 = vmatpush2.bf16.msra.mxu0 0
        %422 = vmatprep.subr.bf16.mxu0 0
        %423 = vmatpush2.bf16.msra.mxu0 0
        %424 = vmatprep.subr.bf16.mxu0 0
        %425 = vmatpush2.bf16.msra.mxu0 0
        %426 = vmatprep.subr.bf16.mxu0 0
        %427 = vmatpush2.bf16.msra.mxu0 0
        %428 = vmatprep.mubr.bf16.mxu0 0
        %429 = vmatmul.mubr.bf16.gmra.mxu0 %v394
        %v430 = vpop.f32.mrf.mxu0
        %v431 = vadd.f32 0.0, %v430
        %v432 = vpop.f32.mrf.mxu0
        %v433 = vpop.f32.mrf.mxu0
        %v434 = vpop.f32.mrf.mxu0
        %435 = vdwg.mxu0
        %v436 = vld [vmem:[%s374] sm:$0xff]
        %438 = vset.pattern.permute.xlu0 0
        %439 = vperm.xlu0 %438, %v436
        %v440 = vpop.permute.xlu0 %439
        %v442 = vmul.f32 %v431, %v440
        %v447 = vunpack.c.l.b16 %v378
        %v448 = vunpack.c.l.b16 %v379
        %v449 = vunpack.c.l.b16 %v380
        %v450 = vunpack.c.l.b16 %v381
        %v451 = vpack.c.b16 %v448, %v447
        %v452 = vpack.c.b16 %v450, %v449
        %vm455 = vcmask 261120
        %v457 = vsel %vm455, %v377, 0
        %459 = vmatprep.subr.bf16.mxu0 0
        %460 = vmatpush1.bf16.msra.mxu0 0
        %461 = vmatprep.subr.bf16.mxu0 0
        %462 = vmatpush1.bf16.msra.mxu0 0
        %463 = vmatprep.subr.bf16.mxu0 0
        %464 = vmatpush1.bf16.msra.mxu0 0
        %465 = vmatprep.subr.bf16.mxu0 0
        %466 = vmatpush1.bf16.msra.mxu0 0
        %467 = vmatprep.subr.bf16.mxu0 0
        %468 = vmatpush1.bf16.msra.mxu0 0
        %469 = vmatprep.subr.bf16.mxu0 0
        %470 = vmatpush1.bf16.msra.mxu0 0
        %471 = vmatprep.subr.bf16.mxu0 0
        %472 = vmatpush1.bf16.msra.mxu0 %v452
        %473 = vmatprep.subr.bf16.mxu0 0
        %474 = vmatpush1.bf16.msra.mxu0 %v451
        %475 = vmatprep.subr.bf16.mxu0 0
        %476 = vmatpush2.bf16.msra.mxu0 0
        %477 = vmatprep.subr.bf16.mxu0 0
        %478 = vmatpush2.bf16.msra.mxu0 0
        %479 = vmatprep.subr.bf16.mxu0 0
        %480 = vmatpush2.bf16.msra.mxu0 0
        %481 = vmatprep.subr.bf16.mxu0 0
        %482 = vmatpush2.bf16.msra.mxu0 0
        %483 = vmatprep.subr.bf16.mxu0 0
        %484 = vmatpush2.bf16.msra.mxu0 0
        %485 = vmatprep.subr.bf16.mxu0 0
        %486 = vmatpush2.bf16.msra.mxu0 0
        %487 = vmatprep.subr.bf16.mxu0 0
        %488 = vmatpush2.bf16.msra.mxu0 0
        %489 = vmatprep.subr.bf16.mxu0 0
        %490 = vmatpush2.bf16.msra.mxu0 0
        %491 = vmatprep.mubr.bf16.mxu0 0
        %492 = vmatmul.mubr.bf16.gmra.mxu0 %v457
        %v493 = vpop.f32.mrf.mxu0
        %v494 = vadd.f32 %v442, %v493
        %v495 = vpop.f32.mrf.mxu0
        %v496 = vpop.f32.mrf.mxu0
        %v497 = vpop.f32.mrf.mxu0
        %498 = vdwg.mxu0
        %v499 = vld [vmem:[#allocation7] sm:$0xf]
        %v500 = vunpack.c.l.bf16 %v499
        %v501 = vadd.f32 %v500, %v494
        %502 = vst.msk [vmem:[%s370] sm:$0xff] %vm455, %v501
        %s503 = sand.u32 %s199, 1
        %s504 = scalar_lea.sflag [#allocation4], %s503
        %s505 = sand.u32 %s199, 1
        %s506 = smul.addr %s505, 8
        %s507 = scalar_lea.vmem [#allocation10], %s506
        // Predicated region
        $region61: #{tpu_custom_call.1} parent=43 // pred_check
          %p508 = pneg %p209
        $region62: #{tpu_custom_call.1} parent=43 // pred_check_branch
          %510 = sbr.rel (%p508) target = $region64
        $region63: #{tpu_custom_call.1} parent=43 // pred_region
          %s512 = ssub.s32 128, 128
          %513 = vsyncadd %s504, %s512
          %s514 = sadd.s32 %s31, %s32
          %s515 = smul.addr %s514, 128
          %s516 = scalar_lea.hbm %s6, %s515
          %s518 = sshll.u32 %s507, 4
          %s519 = int_to_ptr.vmem [resolvable:$true] %s518
          %521 = dma.vmem_to_hbm [thread:$0]  %s519, 128, %s516, %s504
        $region64: #{tpu_custom_call.1} parent=43 // pred_fallthru
          _
      $region44: #{tpu_custom_call.1} parent=5 // pred_fallthru
        _
      %p522 = scmp.le.s32.totalorder 2, %s22
      // Predicated region
      $region65: #{tpu_custom_call.1} parent=5 // pred_check
        %p523 = pneg %p522
      $region66: #{tpu_custom_call.1} parent=5 // pred_check_branch
        %525 = sbr.rel (%p523) target = $region68
      $region67: #{tpu_custom_call.1} parent=5 // pred_region
        %s526 = ssub.s32 %s22, 2
        // Predicated region
        $region69: #{tpu_custom_call.1} parent=67 // pred_check
          %p527 = pneg %p215
        $region70: #{tpu_custom_call.1} parent=67 // pred_check_branch
          %529 = sbr.rel (%p527) target = $region72
        $region71: #{tpu_custom_call.1} parent=67 // pred_region
          %s530 = sand.u32 %s200, 1
          %s531 = scalar_lea.sflag [#allocation4], %s530
          %s532 = sand.u32 %s200, 1
          %s533 = smul.addr %s532, 8
          %s534 = scalar_lea.vmem [#allocation10], %s533
          %535 = dma.done %s531, 128
        $region72: #{tpu_custom_call.1} parent=67 // pred_fallthru
          _
      $region68: #{tpu_custom_call.1} parent=5 // pred_fallthru
        _
    $region6: #{tpu_custom_call.1} parent=1 // loop_footer
      %s26 = sadd.s32 1, %s22
    $region7: #{tpu_custom_call.1} parent=1 // loop_footer_branch
      %21 = sbr.rel target = $region3
    $region8: #{tpu_custom_call.1} parent=1 // loop_exit
      _
    %536 = vsyncpa [#allocation3], 1
    %s537 = scalar_lea.sflag [#allocation3], 1
    %538 = vsyncpa %s537, 1
    %539 = vsyncpa [#allocation6], 1
    %s540 = scalar_lea.sflag [#allocation6], 1
    %541 = vsyncpa %s540, 1
    %542 = vsyncpa [#allocation9], 1
    %543 = vsyncpa [#allocation4], 1
    %s544 = scalar_lea.sflag [#allocation4], 1
    %545 = vsyncpa %s544, 1

</llo_original>
